<compile_context>
chip_gen: v7x
topology: tpu7x:2x2x1
jax: 0.10.0
libtpu: 0.0.40
codegen_flags: <defaults>
</compile_context>

<pallas_src>
import functools
import math

import jax
import jax.numpy as jnp
from jax.experimental import pallas as pl
from jax.experimental.pallas import tpu as pltpu


def _round_up(a, b):
    return (a + b - 1) // b * b


def _mlp_kernel(x_ref, w1_ref, b1_ref, w2_ref, b2_ref, o_ref):
    # x_ref:(tm, xp)  w1_ref:(xp, hp)  b1_ref:(1, hp)  w2_ref:(hp, xp)  b2_ref:(1, xp)
    # Linear_1: native-dtype matmul on the MXU, f32 accumulator.
    h = jnp.dot(x_ref[...], w1_ref[...], preferred_element_type=jnp.float32)
    h = h + b1_ref[...].astype(jnp.float32)
    # Exact (erf-based) GELU in f32 -> matches F.gelu default.
    h = 0.5 * h * (1.0 + jax.lax.erf(h * (1.0 / math.sqrt(2.0))))
    # dropout_1: identity (eval mode)
    # Linear_2: cast activation back to weight dtype for the MXU fast path.
    y = jnp.dot(h.astype(w2_ref.dtype), w2_ref[...],
                preferred_element_type=jnp.float32)
    y = y + b2_ref[...].astype(jnp.float32)
    # dropout_2: identity (eval mode)
    o_ref[...] = y.astype(o_ref.dtype)


def _pick_tile_m(m, xp, hp, x_isz, w_isz, block_m, budget):
    """Largest row tile (multiple of 8, <= block_m) whose VMEM footprint fits budget."""
    # Weights + biases are resident but double-buffered by the BlockSpec pipeline.
    weight_bytes = 2 * w_isz * (2 * xp * hp + hp + xp)
    tm = min(block_m, m)
    if tm < m:
        tm = max(8, (tm // 8) * 8)
    while True:
        act_bytes = 2 * 2 * tm * xp * x_isz        # x + out tiles, double-buffered
        inter_bytes = 4 * tm * (2 * hp + xp)       # f32 h / y intermediates
        if weight_bytes + act_bytes + inter_bytes <= budget or tm <= 8:
            return tm
        tm = max(8, ((tm // 2) // 8) * 8)


@functools.partial(jax.jit, static_argnames=("block_m", "vmem_budget_bytes"))
def mlp_block(x, w1, b1, w2, b2, block_m=512, vmem_budget_bytes=48 * 1024 * 1024):
    """x: (n_samples, n_channels, x_dim) -> same shape/dtype.
    w1: (x_dim, hidden), b1: (hidden,), w2: (hidden, x_dim), b2: (x_dim,)
    (weights stored transposed relative to PyTorch nn.Linear)."""
    n, c, x_dim = x.shape
    hidden = w1.shape[1]
    m = n * c

    # Pad feature dims to multiples of 128 for lane-dense matmuls / stores.
    # Zero padding is exact: padded hidden cols get gelu(0)=0, padded x_dim
    # cols are sliced off at the end.
    xp = _round_up(x_dim, 128)
    hp = _round_up(hidden, 128)

    x2d = x.reshape(m, x_dim)
    if xp != x_dim:
        x2d = jnp.pad(x2d, ((0, 0), (0, xp - x_dim)))
    w1p = jnp.pad(w1, ((0, xp - x_dim), (0, hp - hidden)))
    b1p = jnp.pad(b1, ((0, hp - hidden),)).reshape(1, hp)
    w2p = jnp.pad(w2, ((0, hp - hidden), (0, xp - x_dim)))
    b2p = jnp.pad(b2, ((0, xp - x_dim),)).reshape(1, xp)

    tm = _pick_tile_m(m, xp, hp, x.dtype.itemsize, w1.dtype.itemsize,
                      block_m, vmem_budget_bytes)
    # TODO(synk): if resident weights alone exceed the VMEM budget (very large
    # hidden on v7x's 64 MiB), add an "arbitrary" grid axis over hidden with an
    # f32 VMEM accumulator instead of shrinking tm further.
    grid = (pl.cdiv(m, tm),)

    cost = pl.CostEstimate(
        flops=4 * m * xp * hp,                       # two matmuls
        transcendentals=m * hp,                      # erf
        bytes_accessed=(x2d.size * x2d.dtype.itemsize
                        + w1p.size * w1p.dtype.itemsize
                        + w2p.size * w2p.dtype.itemsize
                        + b1p.size * b1p.dtype.itemsize
                        + b2p.size * b2p.dtype.itemsize
                        + m * xp * x.dtype.itemsize),
    )

    out2d = pl.pallas_call(
        _mlp_kernel,
        out_shape=jax.ShapeDtypeStruct((m, xp), x.dtype),
        grid_spec=pltpu.PrefetchScalarGridSpec(
            num_scalar_prefetch=0,
            grid=grid,
            in_specs=[
                pl.BlockSpec((tm, xp), lambda i: (i, 0)),    # x row tile (streamed)
                pl.BlockSpec((xp, hp), lambda i: (0, 0)),    # W1 (resident)
                pl.BlockSpec((1, hp), lambda i: (0, 0)),     # b1
                pl.BlockSpec((hp, xp), lambda i: (0, 0)),    # W2 (resident)
                pl.BlockSpec((1, xp), lambda i: (0, 0)),     # b2
            ],
            out_specs=pl.BlockSpec((tm, xp), lambda i: (i, 0)),
        ),
        compiler_params=pltpu.CompilerParams(
            dimension_semantics=("parallel",),
            vmem_limit_bytes=int(vmem_budget_bytes),
        ),
        cost_estimate=cost,
    )(x2d, w1p, b1p, w2p, b2p)

    return out2d[:, :x_dim].reshape(n, c, x_dim)


def init_params(key, x_dim, hidden_dim, dtype=jnp.float32):
    """Mirrors nn.Linear default init (uniform +/- 1/sqrt(fan_in)).
    Weights stored transposed relative to PyTorch: (in, out)."""
    k1, k2, k3, k4 = jax.random.split(key, 4)
    bound1 = 1.0 / math.sqrt(x_dim)
    bound2 = 1.0 / math.sqrt(hidden_dim)
    w1 = jax.random.uniform(k1, (x_dim, hidden_dim), dtype, -bound1, bound1)
    b1 = jax.random.uniform(k2, (hidden_dim,), dtype, -bound1, bound1)
    w2 = jax.random.uniform(k3, (hidden_dim, x_dim), dtype, -bound2, bound2)
    b2 = jax.random.uniform(k4, (x_dim,), dtype, -bound2, bound2)
    return w1, b1, w2, b2


def _reference(x, w1, b1, w2, b2):
    h = jnp.einsum("ncp,ph->nch", x, w1) + b1
    h = 0.5 * h * (1.0 + jax.lax.erf(h / jnp.sqrt(2.0)))
    return jnp.einsum("nch,hp->ncp", h, w2) + b2


if __name__ == "__main__":
    # shapes implied by the module: (n_samples, n_channels, n_patches=x_dim)
    n_samples, n_channels, x_dim, hidden_dim = 2, 4, 16, 32

    key = jax.random.PRNGKey(0)
    kx, kp = jax.random.split(key)
    x = jax.random.normal(kx, (n_samples, n_channels, x_dim), jnp.float32)
    w1, b1, w2, b2 = init_params(kp, x_dim, hidden_dim)

    out = mlp_block(x, w1, b1, w2, b2)
    out = jax.block_until_ready(out)

    ref = _reference(x, w1, b1, w2, b2)
    assert out.shape == x.shape and out.dtype == x.dtype
    assert jnp.allclose(out, ref, atol=1e-5, rtol=1e-5)

    print("KERNEL_OK")
</pallas_src>

<mosaic_0001>
module attributes {stable_mosaic.version = 11 : i64} {
  func.func @_mlp_kernel(%arg0: i32, %arg1: memref<8x128xf32, #tpu.memory_space<vmem>>, %arg2: memref<128x128xf32, #tpu.memory_space<vmem>>, %arg3: memref<1x128xf32, #tpu.memory_space<vmem>>, %arg4: memref<128x128xf32, #tpu.memory_space<vmem>>, %arg5: memref<1x128xf32, #tpu.memory_space<vmem>>, %arg6: memref<8x128xf32, #tpu.memory_space<vmem>>) attributes {dimension_semantics = [#tpu.dimension_semantics<parallel>], iteration_bounds = array<i64: 1>, scalar_prefetch = 0 : i64, scratch_operands = 0 : i64, tpu.core_type = #tpu.core_type<tc>, window_params = [{transform_indices = @transform_0, window_bounds = array<i64: 8, 128>}, {pipeline_mode = #tpu.pipeline_mode<synchronous>, transform_indices = @transform_1, window_bounds = array<i64: 128, 128>}, {pipeline_mode = #tpu.pipeline_mode<synchronous>, transform_indices = @transform_2, window_bounds = array<i64: 1, 128>}, {pipeline_mode = #tpu.pipeline_mode<synchronous>, transform_indices = @transform_3, window_bounds = array<i64: 128, 128>}, {pipeline_mode = #tpu.pipeline_mode<synchronous>, transform_indices = @transform_4, window_bounds = array<i64: 1, 128>}, {transform_indices = @transform_5, window_bounds = array<i64: 8, 128>}]} {
    %c0 = arith.constant 0 : index
    %c0_0 = arith.constant 0 : index
    %0 = vector.load %arg1[%c0, %c0_0] : memref<8x128xf32, #tpu.memory_space<vmem>>, vector<8x128xf32>
    %c0_1 = arith.constant 0 : index
    %c0_2 = arith.constant 0 : index
    %1 = vector.load %arg2[%c0_1, %c0_2] : memref<128x128xf32, #tpu.memory_space<vmem>>, vector<128x128xf32>
    %cst = arith.constant dense<0.000000e+00> : vector<8x128xf32>
    %2 = tpu.matmul %0, %1, %cst {dimension_numbers = #tpu.dot_dimension_numbers<[1], [0], [0], [1], [0, 0, 1, 1], [], []>} : vector<8x128xf32>, vector<128x128xf32>, vector<8x128xf32> -> vector<8x128xf32>
    %c0_3 = arith.constant 0 : index
    %c0_4 = arith.constant 0 : index
    %3 = vector.load %arg3[%c0_3, %c0_4] : memref<1x128xf32, #tpu.memory_space<vmem>>, vector<1x128xf32>
    %4 = vector.broadcast %3 : vector<1x128xf32> to vector<8x128xf32>
    %5 = arith.addf %2, %4 : vector<8x128xf32>
    %cst_5 = arith.constant 5.000000e-01 : f32
    %6 = vector.broadcast %cst_5 : f32 to vector<8x128xf32>
    %7 = arith.mulf %6, %5 : vector<8x128xf32>
    %cst_6 = arith.constant 0.707106769 : f32
    %8 = vector.broadcast %cst_6 : f32 to vector<8x128xf32>
    %9 = arith.mulf %5, %8 : vector<8x128xf32>
    %10 = math.erf %9 : vector<8x128xf32>
    %cst_7 = arith.constant 1.000000e+00 : f32
    %11 = vector.broadcast %cst_7 : f32 to vector<8x128xf32>
    %12 = arith.addf %11, %10 : vector<8x128xf32>
    %13 = arith.mulf %7, %12 : vector<8x128xf32>
    %c0_8 = arith.constant 0 : index
    %c0_9 = arith.constant 0 : index
    %14 = vector.load %arg4[%c0_8, %c0_9] : memref<128x128xf32, #tpu.memory_space<vmem>>, vector<128x128xf32>
    %cst_10 = arith.constant dense<0.000000e+00> : vector<8x128xf32>
    %15 = tpu.matmul %13, %14, %cst_10 {dimension_numbers = #tpu.dot_dimension_numbers<[1], [0], [0], [1], [0, 0, 1, 1], [], []>} : vector<8x128xf32>, vector<128x128xf32>, vector<8x128xf32> -> vector<8x128xf32>
    %c0_11 = arith.constant 0 : index
    %c0_12 = arith.constant 0 : index
    %16 = vector.load %arg5[%c0_11, %c0_12] : memref<1x128xf32, #tpu.memory_space<vmem>>, vector<1x128xf32>
    %17 = vector.broadcast %16 : vector<1x128xf32> to vector<8x128xf32>
    %18 = arith.addf %15, %17 : vector<8x128xf32>
    %c0_13 = arith.constant 0 : index
    %c0_14 = arith.constant 0 : index
    %19 = vector.load %arg6[%c0_13, %c0_14] : memref<8x128xf32, #tpu.memory_space<vmem>>, vector<8x128xf32>
    tpu.vector_store %arg6[%c0_13, %c0_14], %18 {strides = array<i32>} : memref<8x128xf32, #tpu.memory_space<vmem>>, vector<8x128xf32>,
    return
  }
  func.func @transform_0(%arg0: i32) -> (i32, i32) {
    %c0_i32 = arith.constant 0 : i32
    %c0_i32_0 = arith.constant 0 : i32
    return %arg0, %c0_i32 : i32, i32
  }
  func.func @transform_1(%arg0: i32) -> (i32, i32) {
    %c0_i32 = arith.constant 0 : i32
    %c0_i32_0 = arith.constant 0 : i32
    %c0_i32_1 = arith.constant 0 : i32
    return %c0_i32, %c0_i32_0 : i32, i32
  }
  func.func @transform_2(%arg0: i32) -> (i32, i32) {
    %c0_i32 = arith.constant 0 : i32
    %c0_i32_0 = arith.constant 0 : i32
    %c0_i32_1 = arith.constant 0 : i32
    return %c0_i32, %c0_i32_0 : i32, i32
  }
  func.func @transform_3(%arg0: i32) -> (i32, i32) {
    %c0_i32 = arith.constant 0 : i32
    %c0_i32_0 = arith.constant 0 : i32
    %c0_i32_1 = arith.constant 0 : i32
    return %c0_i32, %c0_i32_0 : i32, i32
  }
  func.func @transform_4(%arg0: i32) -> (i32, i32) {
    %c0_i32 = arith.constant 0 : i32
    %c0_i32_0 = arith.constant 0 : i32
    %c0_i32_1 = arith.constant 0 : i32
    return %c0_i32, %c0_i32_0 : i32, i32
  }
  func.func @transform_5(%arg0: i32) -> (i32, i32) {
    %c0_i32 = arith.constant 0 : i32
    %c0_i32_0 = arith.constant 0 : i32
    return %arg0, %c0_i32 : i32, i32
  }
}

</mosaic_0001>

<llo_original>
// kernel: mlp_block.1
$region0: #{mlp_block.1}
  #allocation0 [shape = 'u32[]', space=smem, size = 0x4, offset = 0x4, fixed_abs, tag = 'smem constant byte address 0x4 - core index']
  #allocation1 [shape = 'u32[144,128]{1,0:T(1,128)}', space=vmem, size = 0x12000, scoped, tag = 'internal scratch']
  %s0 = inlined_call_operand.vmem [shape: f32[8,128], index: 0, kind: input, shape index: {}]
  %s1 = inlined_call_operand.vmem [shape: f32[128,128], index: 1, kind: input, shape index: {}]
  %s2 = inlined_call_operand.vmem [shape: f32[1,128], index: 2, kind: input, shape index: {}]
  %s3 = inlined_call_operand.vmem [shape: f32[128,128], index: 3, kind: input, shape index: {}]
  %s4 = inlined_call_operand.vmem [shape: f32[1,128], index: 4, kind: input, shape index: {}]
  %s5 = inlined_call_operand.hbm [shape: f32[8,128], index: 5, kind: output, shape index: {}]
  %s6 = sld [smem:[#allocation0]]
  $region30: #{mlp_block.1} parent=0
    _
  %s8 = ssub.s32 1, %s6
  %s9 = scalar_select 0, %s8, %s6
  $region1: #{mlp_block.1} parent=0
    #allocation2 [shape = 'u8[4096]{0}', space=vmem, size = 0x1000, scoped, tag = 'output window, operand 0, single buffered']
    #allocation3 [shape = 's32[1]{0}', space=sflag, size = 0x4, scoped, tag = 'scoped memory for mlp_block.1']
    %10 = vsyncpa [#allocation3], 0
    // Predicated region
    $region2: #{mlp_block.1} parent=1 // pred_check
      _
    $region3: #{mlp_block.1} parent=1 // pred_check_branch
      %12 = sbr.rel (0) target = $region5
    $region4: #{mlp_block.1} parent=1 // pred_region
      _
    $region5: #{mlp_block.1} parent=1 // pred_fallthru
      _
    // Predicated region
    $region6: #{mlp_block.1} parent=1 // pred_check
      _
    $region7: #{mlp_block.1} parent=1 // pred_check_branch
      %14 = sbr.rel (0) target = $region9
    $region8: #{mlp_block.1} parent=1 // pred_region
      _
    $region9: #{mlp_block.1} parent=1 // pred_fallthru
      _
    // Predicated region
    $region10: #{mlp_block.1} parent=1 // pred_check
      _
    $region11: #{mlp_block.1} parent=1 // pred_check_branch
      %16 = sbr.rel (0) target = $region13
    $region12: #{mlp_block.1} parent=1 // pred_region
      _
    $region13: #{mlp_block.1} parent=1 // pred_fallthru
      _
    // Predicated region
    $region14: #{mlp_block.1} parent=1 // pred_check
      _
    $region15: #{mlp_block.1} parent=1 // pred_check_branch
      %18 = sbr.rel (0) target = $region17
    $region16: #{mlp_block.1} parent=1 // pred_region
      _
    $region17: #{mlp_block.1} parent=1 // pred_fallthru
      _
    // Predicated region
    $region18: #{mlp_block.1} parent=1 // pred_check
      _
    $region19: #{mlp_block.1} parent=1 // pred_check_branch
      %20 = sbr.rel (0) target = $region21
    $region20: #{mlp_block.1} parent=1 // pred_region
      _
    $region21: #{mlp_block.1} parent=1 // pred_fallthru
      _
    %v21 = vld [vmem:[%s0] sm:$0xff]
    %v22 = vld [vmem:[%s1] sm:$0xff]
    %v23 = vld [vmem:[%s1 + $0x8] sm:$0xff]
    %v24 = vld [vmem:[%s1 + $0x10] sm:$0xff]
    %v25 = vld [vmem:[%s1 + $0x18] sm:$0xff]
    %v26 = vld [vmem:[%s1 + $0x20] sm:$0xff]
    %v27 = vld [vmem:[%s1 + $0x28] sm:$0xff]
    %v28 = vld [vmem:[%s1 + $0x30] sm:$0xff]
    %v29 = vld [vmem:[%s1 + $0x38] sm:$0xff]
    %v30 = vld [vmem:[%s1 + $0x40] sm:$0xff]
    %v31 = vld [vmem:[%s1 + $0x48] sm:$0xff]
    %v32 = vld [vmem:[%s1 + $0x50] sm:$0xff]
    %v33 = vld [vmem:[%s1 + $0x58] sm:$0xff]
    %v34 = vld [vmem:[%s1 + $0x60] sm:$0xff]
    %v35 = vld [vmem:[%s1 + $0x68] sm:$0xff]
    %v36 = vld [vmem:[%s1 + $0x70] sm:$0xff]
    %v37 = vld [vmem:[%s1 + $0x78] sm:$0xff]
    %v38 = vld [vmem:[%s2] sm:$0x1]
    %v40 = vlaneseq
    %v41 = vshrl.u32 %v40, 7
    %v42 = vsub.s32 0, %v41
    %v43 = vrot.slane %v38, %v42
    %45 = vmatprep.subr.mxu0 0.0
    %46 = vmatpush1.msra.mxu0 %v22
    %47 = vmatprep.subr.mxu0 0.0
    %48 = vmatpush1.msra.mxu0 %v23
    %49 = vmatprep.subr.mxu0 0.0
    %50 = vmatpush1.msra.mxu0 %v24
    %51 = vmatprep.subr.mxu0 0.0
    %52 = vmatpush1.msra.mxu0 %v25
    %53 = vmatprep.subr.mxu0 0.0
    %54 = vmatpush1.msra.mxu0 %v26
    %55 = vmatprep.subr.mxu0 0.0
    %56 = vmatpush1.msra.mxu0 %v27
    %57 = vmatprep.subr.mxu0 0.0
    %58 = vmatpush1.msra.mxu0 %v28
    %59 = vmatprep.subr.mxu0 0.0
    %60 = vmatpush1.msra.mxu0 %v29
    %61 = vmatprep.subr.mxu0 0.0
    %62 = vmatpush1.msra.mxu0 %v30
    %63 = vmatprep.subr.mxu0 0.0
    %64 = vmatpush1.msra.mxu0 %v31
    %65 = vmatprep.subr.mxu0 0.0
    %66 = vmatpush1.msra.mxu0 %v32
    %67 = vmatprep.subr.mxu0 0.0
    %68 = vmatpush1.msra.mxu0 %v33
    %69 = vmatprep.subr.mxu0 0.0
    %70 = vmatpush1.msra.mxu0 %v34
    %71 = vmatprep.subr.mxu0 0.0
    %72 = vmatpush1.msra.mxu0 %v35
    %73 = vmatprep.subr.mxu0 0.0
    %74 = vmatpush1.msra.mxu0 %v36
    %75 = vmatprep.subr.mxu0 0.0
    %76 = vmatpush1.msra.mxu0 %v37
    %77 = vmatprep.subr.mxu0 0.0
    %78 = vmatpush1.msra.mxu0 0.0
    %79 = vmatprep.subr.mxu0 0.0
    %80 = vmatpush1.msra.mxu0 0.0
    %81 = vmatprep.subr.mxu0 0.0
    %82 = vmatpush1.msra.mxu0 0.0
    %83 = vmatprep.subr.mxu0 0.0
    %84 = vmatpush1.msra.mxu0 0.0
    %85 = vmatprep.subr.mxu0 0.0
    %86 = vmatpush1.msra.mxu0 0.0
    %87 = vmatprep.subr.mxu0 0.0
    %88 = vmatpush1.msra.mxu0 0.0
    %89 = vmatprep.subr.mxu0 0.0
    %90 = vmatpush1.msra.mxu0 0.0
    %91 = vmatprep.subr.mxu0 0.0
    %92 = vmatpush1.msra.mxu0 0.0
    %93 = vmatprep.subr.mxu0 0.0
    %94 = vmatpush1.msra.mxu0 0.0
    %95 = vmatprep.subr.mxu0 0.0
    %96 = vmatpush1.msra.mxu0 0.0
    %97 = vmatprep.subr.mxu0 0.0
    %98 = vmatpush1.msra.mxu0 0.0
    %99 = vmatprep.subr.mxu0 0.0
    %100 = vmatpush1.msra.mxu0 0.0
    %101 = vmatprep.subr.mxu0 0.0
    %102 = vmatpush1.msra.mxu0 0.0
    %103 = vmatprep.subr.mxu0 0.0
    %104 = vmatpush1.msra.mxu0 0.0
    %105 = vmatprep.subr.mxu0 0.0
    %106 = vmatpush1.msra.mxu0 0.0
    %107 = vmatprep.subr.mxu0 0.0
    %108 = vmatpush1.msra.mxu0 0.0
    %109 = vmatprep.mubr.f32.mxu0 0.0
    %110 = vmatmul.mubr.f32.gmra.mrb[0].mxu0 %v21
    %v111 = vpop.f32.mrb[0].mxu0
    %v112 = vadd.f32 %v43, %v111
    %v113 = vpop.f32.mrb[0].mxu0
    %114 = vdwg.mxu0
    %v115 = vmul.f32 %v112, 0.5
    %v116 = vmul.f32 %v112, 0.70710677
    %v117 = verf.f32.pop %v116
    %v118 = vadd.f32 %v117, 1.0
    %v119 = vmul.f32 %v115, %v118
    %v120 = vld [vmem:[%s3] sm:$0xff]
    %v121 = vld [vmem:[%s3 + $0x8] sm:$0xff]
    %v122 = vld [vmem:[%s3 + $0x10] sm:$0xff]
    %v123 = vld [vmem:[%s3 + $0x18] sm:$0xff]
    %v124 = vld [vmem:[%s3 + $0x20] sm:$0xff]
    %v125 = vld [vmem:[%s3 + $0x28] sm:$0xff]
    %v126 = vld [vmem:[%s3 + $0x30] sm:$0xff]
    %v127 = vld [vmem:[%s3 + $0x38] sm:$0xff]
    %v128 = vld [vmem:[%s3 + $0x40] sm:$0xff]
    %v129 = vld [vmem:[%s3 + $0x48] sm:$0xff]
    %v130 = vld [vmem:[%s3 + $0x50] sm:$0xff]
    %v131 = vld [vmem:[%s3 + $0x58] sm:$0xff]
    %v132 = vld [vmem:[%s3 + $0x60] sm:$0xff]
    %v133 = vld [vmem:[%s3 + $0x68] sm:$0xff]
    %v134 = vld [vmem:[%s3 + $0x70] sm:$0xff]
    %v135 = vld [vmem:[%s3 + $0x78] sm:$0xff]
    %v136 = vld [vmem:[%s4] sm:$0x1]
    %v138 = vlaneseq
    %v139 = vshrl.u32 %v138, 7
    %v140 = vsub.s32 0, %v139
    %v141 = vrot.slane %v136, %v140
    %143 = vmatprep.subr.mxu0 0.0
    %144 = vmatpush1.msra.mxu0 %v120
    %145 = vmatprep.subr.mxu0 0.0
    %146 = vmatpush1.msra.mxu0 %v121
    %147 = vmatprep.subr.mxu0 0.0
    %148 = vmatpush1.msra.mxu0 %v122
    %149 = vmatprep.subr.mxu0 0.0
    %150 = vmatpush1.msra.mxu0 %v123
    %151 = vmatprep.subr.mxu0 0.0
    %152 = vmatpush1.msra.mxu0 %v124
    %153 = vmatprep.subr.mxu0 0.0
    %154 = vmatpush1.msra.mxu0 %v125
    %155 = vmatprep.subr.mxu0 0.0
    %156 = vmatpush1.msra.mxu0 %v126
    %157 = vmatprep.subr.mxu0 0.0
    %158 = vmatpush1.msra.mxu0 %v127
    %159 = vmatprep.subr.mxu0 0.0
    %160 = vmatpush1.msra.mxu0 %v128
    %161 = vmatprep.subr.mxu0 0.0
    %162 = vmatpush1.msra.mxu0 %v129
    %163 = vmatprep.subr.mxu0 0.0
    %164 = vmatpush1.msra.mxu0 %v130
    %165 = vmatprep.subr.mxu0 0.0
    %166 = vmatpush1.msra.mxu0 %v131
    %167 = vmatprep.subr.mxu0 0.0
    %168 = vmatpush1.msra.mxu0 %v132
    %169 = vmatprep.subr.mxu0 0.0
    %170 = vmatpush1.msra.mxu0 %v133
    %171 = vmatprep.subr.mxu0 0.0
    %172 = vmatpush1.msra.mxu0 %v134
    %173 = vmatprep.subr.mxu0 0.0
    %174 = vmatpush1.msra.mxu0 %v135
    %175 = vmatprep.subr.mxu0 0.0
    %176 = vmatpush1.msra.mxu0 0.0
    %177 = vmatprep.subr.mxu0 0.0
    %178 = vmatpush1.msra.mxu0 0.0
    %179 = vmatprep.subr.mxu0 0.0
    %180 = vmatpush1.msra.mxu0 0.0
    %181 = vmatprep.subr.mxu0 0.0
    %182 = vmatpush1.msra.mxu0 0.0
    %183 = vmatprep.subr.mxu0 0.0
    %184 = vmatpush1.msra.mxu0 0.0
    %185 = vmatprep.subr.mxu0 0.0
    %186 = vmatpush1.msra.mxu0 0.0
    %187 = vmatprep.subr.mxu0 0.0
    %188 = vmatpush1.msra.mxu0 0.0
    %189 = vmatprep.subr.mxu0 0.0
    %190 = vmatpush1.msra.mxu0 0.0
    %191 = vmatprep.subr.mxu0 0.0
    %192 = vmatpush1.msra.mxu0 0.0
    %193 = vmatprep.subr.mxu0 0.0
    %194 = vmatpush1.msra.mxu0 0.0
    %195 = vmatprep.subr.mxu0 0.0
    %196 = vmatpush1.msra.mxu0 0.0
    %197 = vmatprep.subr.mxu0 0.0
    %198 = vmatpush1.msra.mxu0 0.0
    %199 = vmatprep.subr.mxu0 0.0
    %200 = vmatpush1.msra.mxu0 0.0
    %201 = vmatprep.subr.mxu0 0.0
    %202 = vmatpush1.msra.mxu0 0.0
    %203 = vmatprep.subr.mxu0 0.0
    %204 = vmatpush1.msra.mxu0 0.0
    %205 = vmatprep.subr.mxu0 0.0
    %206 = vmatpush1.msra.mxu0 0.0
    %207 = vmatprep.mubr.f32.mxu0 0.0
    %208 = vmatmul.mubr.f32.gmra.mrb[0].mxu0 %v119
    %v209 = vpop.f32.mrb[0].mxu0
    %v210 = vadd.f32 %v141, %v209
    %v211 = vpop.f32.mrb[0].mxu0
    %212 = vdwg.mxu0
    %213 = vst [vmem:[#allocation2] sm:$0xff] %v210
    // Predicated region
    $region22: #{mlp_block.1} parent=1 // pred_check
      _
    $region23: #{mlp_block.1} parent=1 // pred_check_branch
      %215 = sbr.rel (0) target = $region25
    $region24: #{mlp_block.1} parent=1 // pred_region
      %s217 = ssub.s32 128, 128
      %218 = vsyncadd [#allocation3], %s217
      %s220 = sshll.u32 [#allocation2], 4
      %s221 = int_to_ptr.vmem [resolvable:$true] %s220
      %223 = dma.vmem_to_hbm [thread:$0]  %s221, 128, %s5, [#allocation3]
    $region25: #{mlp_block.1} parent=1 // pred_fallthru
      _
    // Predicated region
    $region26: #{mlp_block.1} parent=1 // pred_check
      _
    $region27: #{mlp_block.1} parent=1 // pred_check_branch
      %225 = sbr.rel (0) target = $region29
    $region28: #{mlp_block.1} parent=1 // pred_region
      %226 = dma.done [#allocation3], 128
    $region29: #{mlp_block.1} parent=1 // pred_fallthru
      _
    %227 = vsyncpa [#allocation3], 1

</llo_original>
